<compile_context>
chip_gen: v7x
topology: tpu7x:2x2x1
jax: 0.10.0
libtpu: 0.0.40
codegen_flags: <defaults>
</compile_context>

<pallas_src>
import functools

import jax
import jax.numpy as jnp
from jax.experimental import pallas as pl
from jax.experimental.pallas import tpu as pltpu


def _round_up(n, m):
    return ((n + m - 1) // m) * m


# ----------------------------- Pallas kernel --------------------------------

def mixer_kernel(x_ref, w1t_ref, wtok_ref, bias_ref, gamma_ref, beta_ref,
                 o_ref, *, c_true, matmul_dtype):
    # x_ref block: (rows, Cp) = tb batch elements of (S, Cp) stacked along rows.
    x_f32 = x_ref[...].astype(jnp.float32)            # skip path (f32)
    x_mm = x_f32.astype(matmul_dtype)                 # single bf16 cast, reused

    # channel mix: x @ W1^T  (pos and b1 already folded into bias_ref)
    h = jnp.dot(x_mm, w1t_ref[...], preferred_element_type=jnp.float32)

    # token mix (proj3 o proj2 folded to W32 = W3 @ W2, block-diag over tb):
    # one (rows, rows) @ (rows, Cp) matmul, no transposes, no per-batch loop.
    tr = jnp.dot(wtok_ref[...], x_mm, preferred_element_type=jnp.float32)

    # residual + folded biases (pos @ W1^T + b1 + W3 @ b2 + b3);
    # padded channel columns of every term are exactly zero by construction.
    y = h + tr + x_f32 + bias_ref[...]

    # ELU (alpha=1), elementwise in f32.
    y = jnp.where(y > 0, y, jnp.exp(jnp.minimum(y, 0.0)) - 1.0)

    # LayerNorm over the true C channels, one-pass statistics
    # (padded lanes are zero, so the sums are exact).
    s1 = jnp.sum(y, axis=-1, keepdims=True)
    s2 = jnp.sum(y * y, axis=-1, keepdims=True)
    mean = s1 / c_true
    var = s2 / c_true - mean * mean                   # biased variance (torch LN)
    y = (y - mean) * jax.lax.rsqrt(var + 1e-5)
    y = y * gamma_ref[...] + beta_ref[...]

    o_ref[...] = y.astype(o_ref.dtype)                # single dense lane-wide store


# ----------------------------- tb heuristic ----------------------------------

def _pick_tb(batch, seq, c_pad, *, max_block_bytes=8 << 20, min_grid=1,
             max_rows=512):
    """Largest tb dividing batch whose per-step VMEM footprint fits the budget.

    Per-generation tuning:
      v5e/v6e (1 TC): min_grid=1 (extra grid steps are pure overhead); raise
        max_block_bytes (e.g. 16-32 MiB) and pass vmem_limit_bytes ~64-96 MiB.
      v7x (2 TC, 64 MiB VMEM): min_grid=2 so ("parallel",) shards batch blocks
        across both TCs; keep activation blocks ~8-12 MiB.
    max_rows caps the kron(I_tb, W32) zero-fill waste; beyond it, switch the
    token mix back to a pl.loop of folded (S,S)@(S,Cp) matmuls.
    """
    best = 1
    for tb in range(1, batch + 1):
        if batch % tb:
            continue
        grid_len = batch // tb
        if grid_len < min_grid:
            continue
        rows = tb * seq
        if rows > max_rows:
            continue
        if rows % 8 and grid_len > 1:        # (8,128) sublane rule unless full array
            continue
        footprint = (2 * 2 * rows * c_pad * 4   # double-buffered x / out blocks (f32)
                     + rows * rows * 2          # block-diag token weight (bf16)
                     + rows * c_pad * 4)        # folded bias (f32)
        if footprint > max_block_bytes:
            continue
        best = tb
    return best


# ------------------------ one-time parameter prep ----------------------------

def prepare_mixer_params(params, seq, channels, tb, matmul_dtype=jnp.bfloat16):
    """Fold/pad/cast parameters once; hoist this out of the per-call path."""
    pos, w1, b1, w2, b2, w3, b3, gamma, beta = params
    S, C = seq, channels
    c_pad = _round_up(C, 128)
    pad_c = c_pad - C
    rows = tb * S

    # channel mix weight: W1^T, zero-padded both ways -> padded output cols are 0
    w1t = jnp.pad(w1.T, ((0, pad_c), (0, pad_c))).astype(matmul_dtype)   # (Cp, Cp)

    # token-mix fold (exact: no nonlinearity between proj2 and proj3):
    #   tr_b = W32 @ x_b + b_tok,  W32 = W3 @ W2 (S,S),  b_tok = W3 @ b2 + b3
    w32 = w3 @ w2                                                         # f32 (S, S)
    b_tok = w3 @ b2 + b3                                                  # f32 (S,)
    wtok = jnp.kron(jnp.eye(tb, dtype=w32.dtype), w32).astype(matmul_dtype)  # (rows, rows)

    # bias fold: pos @ W1^T + b1 (channel mix) + b_tok broadcast over channels,
    # computed in f32, padded channel columns exactly zero, tiled over tb.
    bias = pos[0] @ w1.T + b1 + b_tok[:, None]                            # (S, C) f32
    bias = jnp.pad(bias, ((0, 0), (0, pad_c)))                            # (S, Cp)
    bias = jnp.tile(bias, (tb, 1)).astype(jnp.float32)                    # (rows, Cp)

    gammap = jnp.pad(gamma, (0, pad_c)).reshape(1, c_pad).astype(jnp.float32)
    betap = jnp.pad(beta, (0, pad_c)).reshape(1, c_pad).astype(jnp.float32)

    return dict(w1t=w1t, wtok=wtok, bias=bias, gamma=gammap, beta=betap,
                tb=tb, seq=S, channels=C, c_pad=c_pad)


# ------------------------------- wrappers -------------------------------------

def mixer_block_prepared(x, prepped, *, vmem_limit_bytes=None):
    B, S, C = x.shape
    assert S == prepped["seq"] and C == prepped["channels"]
    tb, c_pad = prepped["tb"], prepped["c_pad"]
    assert B % tb == 0, "tb must divide batch"
    pad_c = c_pad - C
    rows = tb * S

    # TODO(synk): in a full model keep the padded (B*S, Cp) slab layout across
    # adjacent ops; this pad/reshape and the [:, :, :C] slice below each
    # materialize a full HBM copy of the activations.
    x2 = jnp.pad(x, ((0, 0), (0, 0), (0, pad_c))).reshape(B * S, c_pad)

    kernel = functools.partial(mixer_kernel, c_true=C,
                               matmul_dtype=prepped["w1t"].dtype)

    out2 = pl.pallas_call(
        kernel,
        out_shape=jax.ShapeDtypeStruct((B * S, c_pad), x.dtype),
        grid_spec=pltpu.PrefetchScalarGridSpec(
            num_scalar_prefetch=0,
            grid=(B // tb,),
            in_specs=[
                # x rows (streamed).  v5e: add pipeline_mode=pl.Buffered(3)
                # here and on out_specs if the DMA is exposed at large tb.
                pl.BlockSpec((rows, c_pad), lambda i: (i, 0)),
                pl.BlockSpec((c_pad, c_pad), lambda i: (0, 0)),  # W1^T (bf16)
                pl.BlockSpec((rows, rows), lambda i: (0, 0)),    # kron(I_tb, W3@W2) (bf16)
                pl.BlockSpec((rows, c_pad), lambda i: (0, 0)),   # folded bias (f32)
                pl.BlockSpec((1, c_pad), lambda i: (0, 0)),      # LN gamma
                pl.BlockSpec((1, c_pad), lambda i: (0, 0)),      # LN beta
            ],
            out_specs=pl.BlockSpec((rows, c_pad), lambda i: (i, 0)),
        ),
        compiler_params=pltpu.CompilerParams(
            dimension_semantics=("parallel",),      # v7x: shard batch blocks over 2 TCs
            vmem_limit_bytes=vmem_limit_bytes),     # v6e: raise to grow tb into 128 MiB
    )(x2, prepped["w1t"], prepped["wtok"], prepped["bias"],
      prepped["gamma"], prepped["beta"])

    return out2.reshape(B, S, c_pad)[:, :, :C]


def mixer_block(x, params, *, tb=None, matmul_dtype=jnp.bfloat16,
                min_grid=1, max_block_bytes=8 << 20, vmem_limit_bytes=None):
    """Convenience wrapper; for repeated calls hoist prepare_mixer_params()."""
    B, S, C = x.shape
    c_pad = _round_up(C, 128)
    if tb is None:
        tb = _pick_tb(B, S, c_pad, max_block_bytes=max_block_bytes,
                      min_grid=min_grid)
    prepped = prepare_mixer_params(params, S, C, tb, matmul_dtype=matmul_dtype)
    return mixer_block_prepared(x, prepped, vmem_limit_bytes=vmem_limit_bytes)


# ------------------------ parameter initialization ---------------------------

def weight_norm_effective(v, g):
    """PyTorch weight_norm: W = g * v / ||v|| with norm over all dims except 0."""
    norm = jnp.sqrt(jnp.sum(v * v, axis=1, keepdims=True))
    return g[:, None] * v / norm


def init_params(key, S, C):
    ks = jax.random.split(key, 10)
    pos = jax.random.uniform(ks[0], (1, S, C), jnp.float32, -0.01, 0.01)

    # proj1: Linear(C, C) with weight_norm
    v1 = jax.random.normal(ks[1], (C, C), jnp.float32) * 0.05
    g1 = jax.random.uniform(ks[2], (C,), jnp.float32, 0.5, 1.5)
    w1 = weight_norm_effective(v1, g1)
    b1 = jax.random.normal(ks[3], (C,), jnp.float32) * 0.05

    # proj2: Linear(S, C) with weight_norm
    v2 = jax.random.normal(ks[4], (C, S), jnp.float32) * 0.05
    g2 = jax.random.uniform(ks[5], (C,), jnp.float32, 0.5, 1.5)
    w2 = weight_norm_effective(v2, g2)
    b2 = jax.random.normal(ks[6], (C,), jnp.float32) * 0.05

    # proj3: Linear(C, S) with weight_norm
    v3 = jax.random.normal(ks[7], (S, C), jnp.float32) * 0.05
    g3 = jax.random.uniform(ks[8], (S,), jnp.float32, 0.5, 1.5)
    w3 = weight_norm_effective(v3, g3)
    b3 = jax.random.normal(ks[9], (S,), jnp.float32) * 0.05

    gamma = jnp.ones((C,), jnp.float32)
    beta = jnp.zeros((C,), jnp.float32)
    return (pos, w1, b1, w2, b2, w3, b3, gamma, beta)


# --------------------------- pure-JAX reference -------------------------------
# Mirrors the original PyTorch dataflow with the kernel's fold + precision
# choices (folded token mix / pos bias, bf16 matmul operands, f32 accumulation
# and elementwise math).

def mixer_block_ref(x, params, matmul_dtype=jnp.bfloat16):
    pos, w1, b1, w2, b2, w3, b3, gamma, beta = params
    md = matmul_dtype

    w32 = (w3 @ w2).astype(md)                       # folded token-mix weight
    b_tok = w3 @ b2 + b3                             # (S,)  f32
    bias_ch = pos[0] @ w1.T + b1                     # (S, C) f32 (pos fold)

    x_mm = x.astype(md)
    h = jnp.einsum('bsc,kc->bsk', x_mm, w1.astype(md),
                   preferred_element_type=jnp.float32)                  # (B, S, C)
    tr = jnp.einsum('js,bsc->bjc', w32, x_mm,
                    preferred_element_type=jnp.float32)                 # (B, S, C)

    y = h + tr + x + bias_ch[None] + b_tok[None, :, None]
    y = jnp.where(y > 0, y, jnp.exp(jnp.minimum(y, 0.0)) - 1.0)
    mean = jnp.mean(y, axis=-1, keepdims=True)
    var = jnp.mean((y - mean) ** 2, axis=-1, keepdims=True)
    y = (y - mean) * jax.lax.rsqrt(var + 1e-5)
    return y * gamma + beta


# --------------------------------- main ---------------------------------------

if __name__ == "__main__":
    B, S, C = 4, 8, 32   # batch, sequence_length, channels

    key = jax.random.PRNGKey(0)
    kx, kp = jax.random.split(key)
    x = jax.random.normal(kx, (B, S, C), jnp.float32)
    params = init_params(kp, S, C)

    # One-time parameter prep (hoisted out of the per-call path).
    c_pad = _round_up(C, 128)
    tb = _pick_tb(B, S, c_pad, min_grid=1)
    prepped = prepare_mixer_params(params, S, C, tb, matmul_dtype=jnp.bfloat16)

    out = jax.block_until_ready(mixer_block_prepared(x, prepped))
    ref = mixer_block_ref(x, params, matmul_dtype=jnp.bfloat16)

    assert out.shape == (B, S, C)
    max_diff = float(jnp.max(jnp.abs(out - ref)))
    assert jnp.allclose(out, ref, atol=2e-3, rtol=2e-3), (
        f"mismatch vs reference, max abs diff {max_diff:.3e}")

    print("KERNEL_OK")
</pallas_src>

<mosaic_0001>
module attributes {stable_mosaic.version = 11 : i64} {
  func.func @mixer_kernel(%arg0: i32, %arg1: memref<32x128xf32, #tpu.memory_space<vmem>>, %arg2: memref<128x128xbf16, #tpu.memory_space<vmem>>, %arg3: memref<32x32xbf16, #tpu.memory_space<vmem>>, %arg4: memref<32x128xf32, #tpu.memory_space<vmem>>, %arg5: memref<1x128xf32, #tpu.memory_space<vmem>>, %arg6: memref<1x128xf32, #tpu.memory_space<vmem>>, %arg7: memref<32x128xf32, #tpu.memory_space<vmem>>) attributes {dimension_semantics = [#tpu.dimension_semantics<parallel>], iteration_bounds = array<i64: 1>, scalar_prefetch = 0 : i64, scratch_operands = 0 : i64, tpu.core_type = #tpu.core_type<tc>, window_params = [{transform_indices = @transform_0, window_bounds = array<i64: 32, 128>}, {pipeline_mode = #tpu.pipeline_mode<synchronous>, transform_indices = @transform_1, window_bounds = array<i64: 128, 128>}, {pipeline_mode = #tpu.pipeline_mode<synchronous>, transform_indices = @transform_2, window_bounds = array<i64: 32, 32>}, {pipeline_mode = #tpu.pipeline_mode<synchronous>, transform_indices = @transform_3, window_bounds = array<i64: 32, 128>}, {pipeline_mode = #tpu.pipeline_mode<synchronous>, transform_indices = @transform_4, window_bounds = array<i64: 1, 128>}, {pipeline_mode = #tpu.pipeline_mode<synchronous>, transform_indices = @transform_5, window_bounds = array<i64: 1, 128>}, {transform_indices = @transform_6, window_bounds = array<i64: 32, 128>}]} {
    %c0 = arith.constant 0 : index
    %c0_0 = arith.constant 0 : index
    %0 = vector.load %arg1[%c0, %c0_0] : memref<32x128xf32, #tpu.memory_space<vmem>>, vector<32x128xf32>
    %1 = arith.truncf %0 : vector<32x128xf32> to vector<32x128xbf16>
    %c0_1 = arith.constant 0 : index
    %c0_2 = arith.constant 0 : index
    %2 = vector.load %arg2[%c0_1, %c0_2] : memref<128x128xbf16, #tpu.memory_space<vmem>>, vector<128x128xbf16>
    %cst = arith.constant dense<0.000000e+00> : vector<32x128xf32>
    %3 = tpu.matmul %1, %2, %cst {dimension_numbers = #tpu.dot_dimension_numbers<[1], [0], [0], [1], [0, 0, 1, 1], [], []>} : vector<32x128xbf16>, vector<128x128xbf16>, vector<32x128xf32> -> vector<32x128xf32>
    %c0_3 = arith.constant 0 : index
    %c0_4 = arith.constant 0 : index
    %4 = vector.load %arg3[%c0_3, %c0_4] : memref<32x32xbf16, #tpu.memory_space<vmem>>, vector<32x32xbf16>
    %cst_5 = arith.constant dense<0.000000e+00> : vector<32x128xf32>
    %5 = tpu.matmul %4, %1, %cst_5 {dimension_numbers = #tpu.dot_dimension_numbers<[1], [0], [0], [1], [0, 0, 1, 1], [], []>} : vector<32x32xbf16>, vector<32x128xbf16>, vector<32x128xf32> -> vector<32x128xf32>
    %6 = arith.addf %3, %5 : vector<32x128xf32>
    %7 = arith.addf %6, %0 : vector<32x128xf32>
    %c0_6 = arith.constant 0 : index
    %c0_7 = arith.constant 0 : index
    %8 = vector.load %arg4[%c0_6, %c0_7] : memref<32x128xf32, #tpu.memory_space<vmem>>, vector<32x128xf32>
    %9 = arith.addf %7, %8 : vector<32x128xf32>
    %cst_8 = arith.constant 0.000000e+00 : f32
    %10 = vector.broadcast %cst_8 : f32 to vector<32x128xf32>
    %11 = arith.cmpf ogt, %9, %10 : vector<32x128xf32>
    %cst_9 = arith.constant 0.000000e+00 : f32
    %12 = vector.broadcast %cst_9 : f32 to vector<32x128xf32>
    %13 = arith.minimumf %9, %12 : vector<32x128xf32>
    %14 = math.exp %13 : vector<32x128xf32>
    %cst_10 = arith.constant 1.000000e+00 : f32
    %15 = vector.broadcast %cst_10 : f32 to vector<32x128xf32>
    %16 = arith.subf %14, %15 : vector<32x128xf32>
    %17 = arith.select %11, %9, %16 : vector<32x128xi1>, vector<32x128xf32>
    %cst_11 = arith.constant dense<0.000000e+00> : vector<32xf32>
    %18 = vector.multi_reduction <add>, %17, %cst_11 [1] : vector<32x128xf32> to vector<32xf32>
    %19 = vector.shape_cast %18 : vector<32xf32> to vector<32x1xf32>
    %20 = arith.mulf %17, %17 : vector<32x128xf32>
    %cst_12 = arith.constant dense<0.000000e+00> : vector<32xf32>
    %21 = vector.multi_reduction <add>, %20, %cst_12 [1] : vector<32x128xf32> to vector<32xf32>
    %22 = vector.shape_cast %21 : vector<32xf32> to vector<32x1xf32>
    %cst_13 = arith.constant 3.200000e+01 : f32
    %23 = vector.broadcast %cst_13 : f32 to vector<32x1xf32>
    %24 = arith.divf %19, %23 : vector<32x1xf32>
    %cst_14 = arith.constant 3.200000e+01 : f32
    %25 = vector.broadcast %cst_14 : f32 to vector<32x1xf32>
    %26 = arith.divf %22, %25 : vector<32x1xf32>
    %27 = arith.mulf %24, %24 : vector<32x1xf32>
    %28 = arith.subf %26, %27 : vector<32x1xf32>
    %29 = vector.broadcast %24 : vector<32x1xf32> to vector<32x128xf32>
    %30 = arith.subf %17, %29 : vector<32x128xf32>
    %cst_15 = arith.constant 9.99999974E-6 : f32
    %31 = vector.broadcast %cst_15 : f32 to vector<32x1xf32>
    %32 = arith.addf %28, %31 : vector<32x1xf32>
    %33 = math.rsqrt %32 : vector<32x1xf32>
    %34 = vector.broadcast %33 : vector<32x1xf32> to vector<32x128xf32>
    %35 = arith.mulf %30, %34 : vector<32x128xf32>
    %c0_16 = arith.constant 0 : index
    %c0_17 = arith.constant 0 : index
    %36 = vector.load %arg5[%c0_16, %c0_17] : memref<1x128xf32, #tpu.memory_space<vmem>>, vector<1x128xf32>
    %37 = vector.broadcast %36 : vector<1x128xf32> to vector<32x128xf32>
    %38 = arith.mulf %35, %37 : vector<32x128xf32>
    %c0_18 = arith.constant 0 : index
    %c0_19 = arith.constant 0 : index
    %39 = vector.load %arg6[%c0_18, %c0_19] : memref<1x128xf32, #tpu.memory_space<vmem>>, vector<1x128xf32>
    %40 = vector.broadcast %39 : vector<1x128xf32> to vector<32x128xf32>
    %41 = arith.addf %38, %40 : vector<32x128xf32>
    %c0_20 = arith.constant 0 : index
    %c0_21 = arith.constant 0 : index
    %42 = vector.load %arg7[%c0_20, %c0_21] : memref<32x128xf32, #tpu.memory_space<vmem>>, vector<32x128xf32>
    tpu.vector_store %arg7[%c0_20, %c0_21], %41 {strides = array<i32>} : memref<32x128xf32, #tpu.memory_space<vmem>>, vector<32x128xf32>,
    return
  }
  func.func @transform_0(%arg0: i32) -> (i32, i32) {
    %c0_i32 = arith.constant 0 : i32
    %c0_i32_0 = arith.constant 0 : i32
    return %arg0, %c0_i32 : i32, i32
  }
  func.func @transform_1(%arg0: i32) -> (i32, i32) {
    %c0_i32 = arith.constant 0 : i32
    %c0_i32_0 = arith.constant 0 : i32
    %c0_i32_1 = arith.constant 0 : i32
    return %c0_i32, %c0_i32_0 : i32, i32
  }
  func.func @transform_2(%arg0: i32) -> (i32, i32) {
    %c0_i32 = arith.constant 0 : i32
    %c0_i32_0 = arith.constant 0 : i32
    %c0_i32_1 = arith.constant 0 : i32
    return %c0_i32, %c0_i32_0 : i32, i32
  }
  func.func @transform_3(%arg0: i32) -> (i32, i32) {
    %c0_i32 = arith.constant 0 : i32
    %c0_i32_0 = arith.constant 0 : i32
    %c0_i32_1 = arith.constant 0 : i32
    return %c0_i32, %c0_i32_0 : i32, i32
  }
  func.func @transform_4(%arg0: i32) -> (i32, i32) {
    %c0_i32 = arith.constant 0 : i32
    %c0_i32_0 = arith.constant 0 : i32
    %c0_i32_1 = arith.constant 0 : i32
    return %c0_i32, %c0_i32_0 : i32, i32
  }
  func.func @transform_5(%arg0: i32) -> (i32, i32) {
    %c0_i32 = arith.constant 0 : i32
    %c0_i32_0 = arith.constant 0 : i32
    %c0_i32_1 = arith.constant 0 : i32
    return %c0_i32, %c0_i32_0 : i32, i32
  }
  func.func @transform_6(%arg0: i32) -> (i32, i32) {
    %c0_i32 = arith.constant 0 : i32
    %c0_i32_0 = arith.constant 0 : i32
    return %arg0, %c0_i32 : i32, i32
  }
}

</mosaic_0001>

<llo_original>
// kernel: tpu_custom_call.1
$region0: #{tpu_custom_call.1}
  #allocation0 [shape = 'u32[]', space=smem, size = 0x4, offset = 0x4, fixed_abs, tag = 'smem constant byte address 0x4 - core index']
  #allocation1 [shape = 'u32[144,128]{1,0:T(1,128)}', space=vmem, size = 0x12000, scoped, tag = 'internal scratch']
  %s0 = inlined_call_operand.hbm [shape: f32[32,128], index: 0, kind: input, shape index: {}]
  %s1 = inlined_call_operand.hbm [shape: bf16[128,128], index: 1, kind: input, shape index: {}]
  %s2 = inlined_call_operand.hbm [shape: bf16[32,32], index: 2, kind: input, shape index: {}]
  %s3 = inlined_call_operand.hbm [shape: f32[32,128], index: 3, kind: input, shape index: {}]
  %s4 = inlined_call_operand.vmem [shape: f32[1,128], index: 4, kind: input, shape index: {}]
  %s5 = inlined_call_operand.vmem [shape: f32[1,128], index: 5, kind: input, shape index: {}]
  %s6 = inlined_call_operand.hbm [shape: f32[32,128], index: 6, kind: output, shape index: {}]
  %s7 = sld [smem:[#allocation0]]
  $region50: #{tpu_custom_call.1} parent=0
    _
  %s9 = ssub.s32 1, %s7
  %s10 = scalar_select 0, %s9, %s7
  $region1: #{tpu_custom_call.1} parent=0
    #allocation2 [shape = 'u8[16384]{0}', space=vmem, size = 0x4000, scoped, tag = 'input window, operand 0, single buffered']
    #allocation3 [shape = 's32[1]{0}', space=sflag, size = 0x4, scoped, tag = 'scoped memory for tpu_custom_call.1']
    #allocation4 [shape = 's32[1]{0}', space=sflag, size = 0x4, scoped, tag = 'scoped memory for tpu_custom_call.1']
    #allocation5 [shape = 'u8[32768]{0}', space=vmem, size = 0x8000, scoped, tag = 'input window, operand 1, single buffered']
    #allocation6 [shape = 's32[1]{0}', space=sflag, size = 0x4, scoped, tag = 'scoped memory for tpu_custom_call.1']
    #allocation7 [shape = 'u8[8192]{0}', space=vmem, size = 0x2000, scoped, tag = 'input window, operand 2, single buffered']
    #allocation8 [shape = 'u8[16384]{0}', space=vmem, size = 0x4000, scoped, tag = 'input window, operand 3, single buffered']
    #allocation9 [shape = 's32[1]{0}', space=sflag, size = 0x4, scoped, tag = 'scoped memory for tpu_custom_call.1']
    #allocation10 [shape = 'u8[16384]{0}', space=vmem, size = 0x4000, scoped, tag = 'output window, operand 0, single buffered']
    %11 = vsyncpa [#allocation3], 0
    %12 = vsyncpa [#allocation6], 0
    %13 = vsyncpa [#allocation9], 0
    %14 = vsyncpa [#allocation4], 0
    // Predicated region
    $region2: #{tpu_custom_call.1} parent=1 // pred_check
      _
    $region3: #{tpu_custom_call.1} parent=1 // pred_check_branch
      %16 = sbr.rel (0) target = $region5
    $region4: #{tpu_custom_call.1} parent=1 // pred_region
      %s18 = ssub.s32 512, 512
      %19 = vsyncadd [#allocation3], %s18
      %s20 = sshll.u32 [#allocation2], 4
      %s21 = int_to_ptr.vmem [resolvable:$true] %s20
      %26 = dma.hbm_to_vmem [thread:$0]  %s0, 512, %s21, [#allocation3], 128, 128, 8
    $region5: #{tpu_custom_call.1} parent=1 // pred_fallthru
      _
    // Predicated region
    $region6: #{tpu_custom_call.1} parent=1 // pred_check
      _
    $region7: #{tpu_custom_call.1} parent=1 // pred_check_branch
      %28 = sbr.rel (0) target = $region9
    $region8: #{tpu_custom_call.1} parent=1 // pred_region
      %s30 = ssub.s32 1024, 1024
      %31 = vsyncadd [#allocation6], %s30
      %s32 = sshll.u32 [#allocation5], 4
      %s33 = int_to_ptr.vmem [resolvable:$true] %s32
      %38 = dma.hbm_to_vmem [thread:$0]  %s1, 1024, %s33, [#allocation6], 64, 64, 4
    $region9: #{tpu_custom_call.1} parent=1 // pred_fallthru
      _
    // Predicated region
    $region10: #{tpu_custom_call.1} parent=1 // pred_check
      _
    $region11: #{tpu_custom_call.1} parent=1 // pred_check_branch
      %40 = sbr.rel (0) target = $region13
    $region12: #{tpu_custom_call.1} parent=1 // pred_region
      %s42 = ssub.s32 256, 256
      %43 = vsyncadd [#allocation6], %s42
      %s44 = sshll.u32 [#allocation7], 4
      %s45 = int_to_ptr.vmem [resolvable:$true] %s44
      %50 = dma.hbm_to_vmem [thread:$0]  %s2, 256, %s45, [#allocation6], 64, 64, 4
    $region13: #{tpu_custom_call.1} parent=1 // pred_fallthru
      _
    // Predicated region
    $region14: #{tpu_custom_call.1} parent=1 // pred_check
      _
    $region15: #{tpu_custom_call.1} parent=1 // pred_check_branch
      %52 = sbr.rel (0) target = $region17
    $region16: #{tpu_custom_call.1} parent=1 // pred_region
      %s54 = ssub.s32 512, 512
      %55 = vsyncadd [#allocation9], %s54
      %s56 = sshll.u32 [#allocation8], 4
      %s57 = int_to_ptr.vmem [resolvable:$true] %s56
      %62 = dma.hbm_to_vmem [thread:$0]  %s3, 512, %s57, [#allocation9], 128, 128, 8
    $region17: #{tpu_custom_call.1} parent=1 // pred_fallthru
      _
    // Predicated region
    $region18: #{tpu_custom_call.1} parent=1 // pred_check
      _
    $region19: #{tpu_custom_call.1} parent=1 // pred_check_branch
      %64 = sbr.rel (0) target = $region21
    $region20: #{tpu_custom_call.1} parent=1 // pred_region
      _
    $region21: #{tpu_custom_call.1} parent=1 // pred_fallthru
      _
    // Predicated region
    $region22: #{tpu_custom_call.1} parent=1 // pred_check
      _
    $region23: #{tpu_custom_call.1} parent=1 // pred_check_branch
      %66 = sbr.rel (0) target = $region25
    $region24: #{tpu_custom_call.1} parent=1 // pred_region
      _
    $region25: #{tpu_custom_call.1} parent=1 // pred_fallthru
      _
    // Predicated region
    $region26: #{tpu_custom_call.1} parent=1 // pred_check
      _
    $region27: #{tpu_custom_call.1} parent=1 // pred_check_branch
      %68 = sbr.rel (0) target = $region29
    $region28: #{tpu_custom_call.1} parent=1 // pred_region
      %69 = dma.done [#allocation3], 512
    $region29: #{tpu_custom_call.1} parent=1 // pred_fallthru
      _
    // Predicated region
    $region30: #{tpu_custom_call.1} parent=1 // pred_check
      _
    $region31: #{tpu_custom_call.1} parent=1 // pred_check_branch
      %71 = sbr.rel (0) target = $region33
    $region32: #{tpu_custom_call.1} parent=1 // pred_region
      %72 = dma.done [#allocation6], 1024
    $region33: #{tpu_custom_call.1} parent=1 // pred_fallthru
      _
    // Predicated region
    $region34: #{tpu_custom_call.1} parent=1 // pred_check
      _
    $region35: #{tpu_custom_call.1} parent=1 // pred_check_branch
      %74 = sbr.rel (0) target = $region37
    $region36: #{tpu_custom_call.1} parent=1 // pred_region
      %75 = dma.done [#allocation6], 256
    $region37: #{tpu_custom_call.1} parent=1 // pred_fallthru
      _
    // Predicated region
    $region38: #{tpu_custom_call.1} parent=1 // pred_check
      _
    $region39: #{tpu_custom_call.1} parent=1 // pred_check_branch
      %77 = sbr.rel (0) target = $region41
    $region40: #{tpu_custom_call.1} parent=1 // pred_region
      %78 = dma.done [#allocation9], 512
    $region41: #{tpu_custom_call.1} parent=1 // pred_fallthru
      _
    %v80 = vld [vmem:[#allocation2] sm:$0xff]
    %v81 = vld [vmem:[#allocation2 + $0x8] sm:$0xff]
    %v82 = vld [vmem:[#allocation2 + $0x10] sm:$0xff]
    %v83 = vld [vmem:[#allocation2 + $0x18] sm:$0xff]
    %v84 = vpack.c.bf16 %v81, %v80
    %v85 = vpack.c.bf16 %v83, %v82
    %v86 = vld [vmem:[#allocation5] sm:$0xf]
    %v87 = vld [vmem:[#allocation5 + $0x4] sm:$0xf]
    %v88 = vld [vmem:[#allocation5 + $0x8] sm:$0xf]
    %v89 = vld [vmem:[#allocation5 + $0xc] sm:$0xf]
    %v90 = vld [vmem:[#allocation5 + $0x10] sm:$0xf]
    %v91 = vld [vmem:[#allocation5 + $0x14] sm:$0xf]
    %v92 = vld [vmem:[#allocation5 + $0x18] sm:$0xf]
    %v93 = vld [vmem:[#allocation5 + $0x1c] sm:$0xf]
    %v94 = vld [vmem:[#allocation5 + $0x20] sm:$0xf]
    %v95 = vld [vmem:[#allocation5 + $0x24] sm:$0xf]
    %v96 = vld [vmem:[#allocation5 + $0x28] sm:$0xf]
    %v97 = vld [vmem:[#allocation5 + $0x2c] sm:$0xf]
    %v98 = vld [vmem:[#allocation5 + $0x30] sm:$0xf]
    %v99 = vld [vmem:[#allocation5 + $0x34] sm:$0xf]
    %v100 = vld [vmem:[#allocation5 + $0x38] sm:$0xf]
    %v101 = vld [vmem:[#allocation5 + $0x3c] sm:$0xf]
    %v102 = vld [vmem:[#allocation7] sm:$0xf]
    %v103 = vld [vmem:[#allocation7 + $0x4] sm:$0xf]
    %v104 = vld [vmem:[#allocation7 + $0x8] sm:$0xf]
    %v105 = vld [vmem:[#allocation7 + $0xc] sm:$0xf]
    %v110 = vunpack.c.l.b16 %v102
    %v111 = vunpack.c.l.b16 %v103
    %v112 = vunpack.c.l.b16 %v104
    %v113 = vunpack.c.l.b16 %v105
    %v114 = vpack.c.b16 %v111, %v110
    %v115 = vpack.c.b16 %v113, %v112
    %vm116 = vcmask 261120
    %v118 = vsel %vm116, %v114, 0
    %v121 = vsel %vm116, %v115, 0
    %123 = vmatprep.subr.bf16.mxu0 0
    %124 = vmatpush1.bf16.msra.mxu0 %v84
    %125 = vmatprep.subr.bf16.mxu0 0
    %126 = vmatpush1.bf16.msra.mxu0 %v85
    %127 = vmatprep.subr.bf16.mxu0 0
    %128 = vmatpush1.bf16.msra.mxu0 0
    %129 = vmatprep.subr.bf16.mxu0 0
    %130 = vmatpush1.bf16.msra.mxu0 0
    %131 = vmatprep.subr.bf16.mxu0 0
    %132 = vmatpush1.bf16.msra.mxu0 0
    %133 = vmatprep.subr.bf16.mxu0 0
    %134 = vmatpush1.bf16.msra.mxu0 0
    %135 = vmatprep.subr.bf16.mxu0 0
    %136 = vmatpush1.bf16.msra.mxu0 0
    %137 = vmatprep.subr.bf16.mxu0 0
    %138 = vmatpush1.bf16.msra.mxu0 0
    %139 = vmatprep.subr.bf16.mxu0 0
    %140 = vmatpush1.bf16.msra.mxu0 0
    %141 = vmatprep.subr.bf16.mxu0 0
    %142 = vmatpush1.bf16.msra.mxu0 0
    %143 = vmatprep.subr.bf16.mxu0 0
    %144 = vmatpush1.bf16.msra.mxu0 0
    %145 = vmatprep.subr.bf16.mxu0 0
    %146 = vmatpush1.bf16.msra.mxu0 0
    %147 = vmatprep.subr.bf16.mxu0 0
    %148 = vmatpush1.bf16.msra.mxu0 0
    %149 = vmatprep.subr.bf16.mxu0 0
    %150 = vmatpush1.bf16.msra.mxu0 0
    %151 = vmatprep.subr.bf16.mxu0 0
    %152 = vmatpush1.bf16.msra.mxu0 0
    %153 = vmatprep.subr.bf16.mxu0 0
    %154 = vmatpush1.bf16.msra.mxu0 0
    %155 = vmatprep.mubr.bf16.mxu0 0
    %156 = vmatmul.mubr.bf16.gmra.mrb[0].mxu0 %v118
    %v157 = vpop.f32.mrb[0].mxu0
    %v158 = vadd.f32 0.0, %v157
    %v159 = vpop.f32.mrb[0].mxu0
    %v160 = vpop.f32.mrb[0].mxu0
    %v161 = vadd.f32 0.0, %v160
    %v162 = vpop.f32.mrb[0].mxu0
    %163 = vmatprep.mubr.bf16.mxu0 0
    %164 = vmatmul.mubr.bf16.gmra.mrb[0].mxu0 %v121
    %v165 = vpop.f32.mrb[0].mxu0
    %v166 = vadd.f32 0.0, %v165
    %v167 = vpop.f32.mrb[0].mxu0
    %v168 = vpop.f32.mrb[0].mxu0
    %v169 = vadd.f32 0.0, %v168
    %v170 = vpop.f32.mrb[0].mxu0
    %171 = vdwg.mxu0
    %v188 = vunpack.c.l.b16 %v86
    %v189 = vunpack.c.l.b16 %v87
    %v190 = vunpack.c.l.b16 %v88
    %v191 = vunpack.c.l.b16 %v89
    %v192 = vunpack.c.l.b16 %v90
    %v193 = vunpack.c.l.b16 %v91
    %v194 = vunpack.c.l.b16 %v92
    %v195 = vunpack.c.l.b16 %v93
    %v196 = vunpack.c.l.b16 %v94
    %v197 = vunpack.c.l.b16 %v95
    %v198 = vunpack.c.l.b16 %v96
    %v199 = vunpack.c.l.b16 %v97
    %v200 = vunpack.c.l.b16 %v98
    %v201 = vunpack.c.l.b16 %v99
    %v202 = vunpack.c.l.b16 %v100
    %v203 = vunpack.c.l.b16 %v101
    %v204 = vpack.c.b16 %v189, %v188
    %v205 = vpack.c.b16 %v191, %v190
    %v206 = vpack.c.b16 %v193, %v192
    %v207 = vpack.c.b16 %v195, %v194
    %v208 = vpack.c.b16 %v197, %v196
    %v209 = vpack.c.b16 %v199, %v198
    %v210 = vpack.c.b16 %v201, %v200
    %v211 = vpack.c.b16 %v203, %v202
    %220 = vmatprep.subr.bf16.mxu0 0
    %221 = vmatpush1.bf16.msra.mxu0 %v204
    %222 = vmatprep.subr.bf16.mxu0 0
    %223 = vmatpush1.bf16.msra.mxu0 %v205
    %224 = vmatprep.subr.bf16.mxu0 0
    %225 = vmatpush1.bf16.msra.mxu0 %v206
    %226 = vmatprep.subr.bf16.mxu0 0
    %227 = vmatpush1.bf16.msra.mxu0 %v207
    %228 = vmatprep.subr.bf16.mxu0 0
    %229 = vmatpush1.bf16.msra.mxu0 %v208
    %230 = vmatprep.subr.bf16.mxu0 0
    %231 = vmatpush1.bf16.msra.mxu0 %v209
    %232 = vmatprep.subr.bf16.mxu0 0
    %233 = vmatpush1.bf16.msra.mxu0 %v210
    %234 = vmatprep.subr.bf16.mxu0 0
    %235 = vmatpush1.bf16.msra.mxu0 %v211
    %236 = vmatprep.subr.bf16.mxu0 0
    %237 = vmatpush1.bf16.msra.mxu0 0
    %238 = vmatprep.subr.bf16.mxu0 0
    %239 = vmatpush1.bf16.msra.mxu0 0
    %240 = vmatprep.subr.bf16.mxu0 0
    %241 = vmatpush1.bf16.msra.mxu0 0
    %242 = vmatprep.subr.bf16.mxu0 0
    %243 = vmatpush1.bf16.msra.mxu0 0
    %244 = vmatprep.subr.bf16.mxu0 0
    %245 = vmatpush1.bf16.msra.mxu0 0
    %246 = vmatprep.subr.bf16.mxu0 0
    %247 = vmatpush1.bf16.msra.mxu0 0
    %248 = vmatprep.subr.bf16.mxu0 0
    %249 = vmatpush1.bf16.msra.mxu0 0
    %250 = vmatprep.subr.bf16.mxu0 0
    %251 = vmatpush1.bf16.msra.mxu0 0
    %252 = vmatprep.mubr.bf16.mxu0 0
    %253 = vmatmul.mubr.bf16.gmra.mrb[0].mxu0 %v84
    %v254 = vpop.f32.mrb[0].mxu0
    %v255 = vadd.f32 %v158, %v254
    %v256 = vpop.f32.mrb[0].mxu0
    %v257 = vpop.f32.mrb[0].mxu0
    %v258 = vadd.f32 %v161, %v257
    %v259 = vpop.f32.mrb[0].mxu0
    %260 = vmatprep.mubr.bf16.mxu0 0
    %261 = vmatmul.mubr.bf16.gmra.mrb[0].mxu0 %v85
    %v262 = vpop.f32.mrb[0].mxu0
    %v263 = vadd.f32 %v166, %v262
    %v264 = vpop.f32.mrb[0].mxu0
    %v265 = vpop.f32.mrb[0].mxu0
    %v266 = vadd.f32 %v169, %v265
    %v267 = vpop.f32.mrb[0].mxu0
    %268 = vdwg.mxu0
    %v269 = vadd.f32 %v255, %v80
    %v270 = vadd.f32 %v258, %v81
    %v271 = vadd.f32 %v263, %v82
    %v272 = vadd.f32 %v266, %v83
    %v273 = vld [vmem:[#allocation8] sm:$0xff]
    %v274 = vld [vmem:[#allocation8 + $0x8] sm:$0xff]
    %v275 = vld [vmem:[#allocation8 + $0x10] sm:$0xff]
    %v276 = vld [vmem:[#allocation8 + $0x18] sm:$0xff]
    %v277 = vadd.f32 %v269, %v273
    %v278 = vadd.f32 %v270, %v274
    %v279 = vadd.f32 %v271, %v275
    %v280 = vadd.f32 %v272, %v276
    %vm281 = vcmp.gt.f32.partialorder %v277, 0.0
    %vm282 = vcmp.gt.f32.partialorder %v278, 0.0
    %vm283 = vcmp.gt.f32.partialorder %v279, 0.0
    %vm284 = vcmp.gt.f32.partialorder %v280, 0.0
    %v285 = vmin.f32 %v277, 0.0
    %v286 = vmin.f32 %v278, 0.0
    %v287 = vmin.f32 %v279, 0.0
    %v288 = vmin.f32 %v280, 0.0
    %v289 = vmul.f32 %v285, 1.442695
    %v290 = vpow.pop %v289
    %v291 = vmul.f32 %v286, 1.442695
    %v292 = vpow.pop %v291
    %v293 = vmul.f32 %v287, 1.442695
    %v294 = vpow.pop %v293
    %v295 = vmul.f32 %v288, 1.442695
    %v296 = vpow.pop %v295
    %v297 = vsub.f32 %v290, 1.0
    %v298 = vsub.f32 %v292, 1.0
    %v299 = vsub.f32 %v294, 1.0
    %v300 = vsub.f32 %v296, 1.0
    %v301 = vsel %vm281, %v277, %v297
    %v302 = vsel %vm282, %v278, %v298
    %v303 = vsel %vm283, %v279, %v299
    %v304 = vsel %vm284, %v280, %v300
    %305 = vadd.xlane.f32.xlu0 %v301
    %v306 = vpop.xlane.xlu0 %305
    %307 = vadd.xlane.f32.xlu0 %v302
    %v308 = vpop.xlane.xlu0 %307
    %309 = vadd.xlane.f32.xlu0 %v303
    %v310 = vpop.xlane.xlu0 %309
    %311 = vadd.xlane.f32.xlu0 %v304
    %v312 = vpop.xlane.xlu0 %311
    %v313 = vmul.f32 %v301, %v301
    %v314 = vmul.f32 %v302, %v302
    %v315 = vmul.f32 %v303, %v303
    %v316 = vmul.f32 %v304, %v304
    %317 = vadd.xlane.f32.xlu0 %v313
    %v318 = vpop.xlane.xlu0 %317
    %319 = vadd.xlane.f32.xlu0 %v314
    %v320 = vpop.xlane.xlu0 %319
    %321 = vadd.xlane.f32.xlu0 %v315
    %v322 = vpop.xlane.xlu0 %321
    %323 = vadd.xlane.f32.xlu0 %v316
    %v324 = vpop.xlane.xlu0 %323
    %v325 = vrcp.pop 32.0
    %v326 = vmul.f32 %v306, %v325
    %v327 = vmul.f32 %v308, %v325
    %v328 = vmul.f32 %v310, %v325
    %v329 = vmul.f32 %v312, %v325
    %v330 = vmul.f32 %v318, %v325
    %v331 = vmul.f32 %v320, %v325
    %v332 = vmul.f32 %v322, %v325
    %v333 = vmul.f32 %v324, %v325
    %v334 = vmul.f32 %v326, %v326
    %v335 = vmul.f32 %v327, %v327
    %v336 = vmul.f32 %v328, %v328
    %v337 = vmul.f32 %v329, %v329
    %v338 = vsub.f32 %v330, %v334
    %v339 = vsub.f32 %v331, %v335
    %v340 = vsub.f32 %v332, %v336
    %v341 = vsub.f32 %v333, %v337
    %v342 = vsub.f32 %v301, %v326
    %v343 = vsub.f32 %v302, %v327
    %v344 = vsub.f32 %v303, %v328
    %v345 = vsub.f32 %v304, %v329
    %v346 = vadd.f32 %v338, 1e-05
    %v347 = vadd.f32 %v339, 1e-05
    %v348 = vadd.f32 %v340, 1e-05
    %v349 = vadd.f32 %v341, 1e-05
    %v350 = vrsqrt.pop %v346
    %v351 = vrsqrt.pop %v347
    %v352 = vrsqrt.pop %v348
    %v353 = vrsqrt.pop %v349
    %v354 = vmul.f32 %v342, %v350
    %v355 = vmul.f32 %v343, %v351
    %v356 = vmul.f32 %v344, %v352
    %v357 = vmul.f32 %v345, %v353
    %v358 = vld [vmem:[%s4] sm:$0x1]
    %v360 = vlaneseq
    %v361 = vshrl.u32 %v360, 7
    %v362 = vsub.s32 0, %v361
    %v363 = vrot.slane %v358, %v362
    %v365 = vmul.f32 %v354, %v363
    %v366 = vmul.f32 %v355, %v363
    %v367 = vmul.f32 %v356, %v363
    %v368 = vmul.f32 %v357, %v363
    %v369 = vld [vmem:[%s5] sm:$0x1]
    %v371 = vlaneseq
    %v372 = vshrl.u32 %v371, 7
    %v373 = vsub.s32 0, %v372
    %v374 = vrot.slane %v369, %v373
    %v376 = vadd.f32 %v365, %v374
    %v377 = vadd.f32 %v366, %v374
    %v378 = vadd.f32 %v367, %v374
    %v379 = vadd.f32 %v368, %v374
    %380 = vst [vmem:[#allocation10] sm:$0xff] %v376
    %381 = vst [vmem:[#allocation10 + $0x8] sm:$0xff] %v377
    %382 = vst [vmem:[#allocation10 + $0x10] sm:$0xff] %v378
    %383 = vst [vmem:[#allocation10 + $0x18] sm:$0xff] %v379
    // Predicated region
    $region42: #{tpu_custom_call.1} parent=1 // pred_check
      _
    $region43: #{tpu_custom_call.1} parent=1 // pred_check_branch
      %385 = sbr.rel (0) target = $region45
    $region44: #{tpu_custom_call.1} parent=1 // pred_region
      %s387 = ssub.s32 512, 512
      %388 = vsyncadd [#allocation4], %s387
      %s389 = sshll.u32 [#allocation10], 4
      %s390 = int_to_ptr.vmem [resolvable:$true] %s389
      %395 = dma.vmem_to_hbm [thread:$0]  %s390, 512, %s6, [#allocation4], 128, 128, 8
    $region45: #{tpu_custom_call.1} parent=1 // pred_fallthru
      _
    // Predicated region
    $region46: #{tpu_custom_call.1} parent=1 // pred_check
      _
    $region47: #{tpu_custom_call.1} parent=1 // pred_check_branch
      %397 = sbr.rel (0) target = $region49
    $region48: #{tpu_custom_call.1} parent=1 // pred_region
      %398 = dma.done [#allocation4], 512
    $region49: #{tpu_custom_call.1} parent=1 // pred_fallthru
      _
    %399 = vsyncpa [#allocation3], 1
    %400 = vsyncpa [#allocation6], 1
    %401 = vsyncpa [#allocation9], 1
    %402 = vsyncpa [#allocation4], 1

</llo_original>
